<compile_context>
chip_gen: v7x
topology: tpu7x:2x2x1
jax: 0.10.0
libtpu: 0.0.40
codegen_flags: <defaults>
</compile_context>

<pallas_src>
import jax
import jax.numpy as jnp
from jax.experimental import pallas as pl
from jax.experimental.pallas import tpu as pltpu

FEATURE_LIST = [1, 2, 4]
BATCH_SIZE = 4


def fused_linear_kernel(in_ref, o_ref):
    """Single packed input.

    in_ref: (B+2, out) f32
        rows 0..B-1 : x broadcast across the out (lane) axis
        row  B      : W_eff.T   (lane-major)
        row  B+1    : b_eff
    o_ref: (B, out) f32

    out[i, j] = x[i] * W_eff[j] + b_eff[j]  — one VPU broadcast multiply-add
    (in_features == 1, so no MXU / XLU work).
    """
    B = o_ref.shape[0]
    x_b = in_ref[0:B, :]            # (B, out)  static slice
    w_row = in_ref[B:B + 1, :]      # (1, out)  = W_eff.T
    b_row = in_ref[B + 1:B + 2, :]  # (1, out)  = b_eff
    o_ref[...] = x_b * w_row + b_row


def linear_chain_forward(x, w1, b1, w2, b2):
    """Forward of the 2-layer chain.

    x: (B, 1); w1: (2, 1); b1: (2,); w2: (4, 2); b2: (4,)  ->  (B, 4).

    Wrapper-side (XLA, zero per-step kernel cost):
      - fold the purely-affine chain:  W_eff = W2 @ W1,  b_eff = b1 @ W2.T + b2
        (valid only because there is no nonlinearity between the layers),
      - broadcast x to (B, out) and pack everything into ONE (B+2, out) block
        so the pallas_call has exactly one input and one output (2 DMAs total).
    """
    batch = x.shape[0]
    out_features = w2.shape[0]

    w_eff = w2 @ w1                  # (4, 1)
    b_eff = b1 @ w2.T + b2           # (4,)  (== b2 here since biases are 0)

    x_b = jnp.broadcast_to(x, (batch, out_features))          # (B, out)
    packed = jnp.concatenate(
        [x_b, w_eff.T, b_eff.reshape(1, -1)], axis=0
    ).astype(jnp.float32)                                      # (B+2, out)

    vmem_spec = pl.BlockSpec(memory_space=pltpu.VMEM)
    return pl.pallas_call(
        fused_linear_kernel,
        out_shape=jax.ShapeDtypeStruct((batch, out_features), jnp.float32),
        in_specs=[vmem_spec],
        out_specs=vmem_spec,
    )(packed)


def init_params(key, feature_list):
    """Deterministic parameter init (PyTorch-like uniform fan_in bound);
    biases are zero, matching m.bias.data.fill_(0) in the module."""
    params = []
    for i in range(len(feature_list) - 1):
        fan_in, fan_out = feature_list[i], feature_list[i + 1]
        key, sub = jax.random.split(key)
        bound = 1.0 / (fan_in ** 0.5)
        w = jax.random.uniform(sub, (fan_out, fan_in),
                               minval=-bound, maxval=bound,
                               dtype=jnp.float32)
        b = jnp.zeros((fan_out,), dtype=jnp.float32)
        params.append((w, b))
    return params


# TODO(synk): register_backward_hook / forward hooks only print and do not
# affect the forward output; they (and per-layer intermediate capture, which
# the affine fold eliminates) have no Pallas equivalent and are omitted.

if __name__ == "__main__":
    key = jax.random.PRNGKey(0)
    (w1, b1), (w2, b2) = init_params(key, FEATURE_LIST)

    # x = torch.ones(batch_size, 1)
    x = jnp.ones((BATCH_SIZE, FEATURE_LIST[0]), dtype=jnp.float32)

    out = linear_chain_forward(x, w1, b1, w2, b2)
    jax.block_until_ready(out)

    # Cross-check against the un-fused plain-JAX reference of the module.
    ref = (x @ w1.T + b1) @ w2.T + b2
    assert out.shape == (BATCH_SIZE, FEATURE_LIST[-1])
    assert jnp.allclose(out, ref, atol=1e-5, rtol=1e-5)

    print("KERNEL_OK")
</pallas_src>

<mosaic_0001>
module attributes {stable_mosaic.version = 11 : i64} {
  func.func @fused_linear_kernel(%arg0: memref<6x4xf32, #tpu.memory_space<vmem>>, %arg1: memref<4x4xf32, #tpu.memory_space<vmem>>) attributes {dimension_semantics = [], scalar_prefetch = 0 : i64, scratch_operands = 0 : i64, tpu.core_type = #tpu.core_type<tc>} {
    %c0 = arith.constant 0 : index
    %c0_0 = arith.constant 0 : index
    %0 = vector.load %arg0[%c0, %c0_0] : memref<6x4xf32, #tpu.memory_space<vmem>>, vector<4x4xf32>
    %c4 = arith.constant 4 : index
    %c0_1 = arith.constant 0 : index
    %1 = vector.load %arg0[%c4, %c0_1] : memref<6x4xf32, #tpu.memory_space<vmem>>, vector<1x4xf32>
    %c5 = arith.constant 5 : index
    %c0_2 = arith.constant 0 : index
    %2 = vector.load %arg0[%c5, %c0_2] : memref<6x4xf32, #tpu.memory_space<vmem>>, vector<1x4xf32>
    %3 = vector.broadcast %1 : vector<1x4xf32> to vector<4x4xf32>
    %4 = arith.mulf %0, %3 : vector<4x4xf32>
    %5 = vector.broadcast %2 : vector<1x4xf32> to vector<4x4xf32>
    %6 = arith.addf %4, %5 : vector<4x4xf32>
    %c0_3 = arith.constant 0 : index
    %c0_4 = arith.constant 0 : index
    %7 = vector.load %arg1[%c0_3, %c0_4] : memref<4x4xf32, #tpu.memory_space<vmem>>, vector<4x4xf32>
    tpu.vector_store %arg1[%c0_3, %c0_4], %6 {strides = array<i32>} : memref<4x4xf32, #tpu.memory_space<vmem>>, vector<4x4xf32>,
    return
  }
}

</mosaic_0001>

<llo_original>
// kernel: tpu_custom_call.1
$region0: #{tpu_custom_call.1}
  #allocation0 [shape = 'u32[]', space=smem, size = 0x4, offset = 0x4, fixed_abs, tag = 'smem constant byte address 0x4 - core index']
  #allocation1 [shape = 'u32[144,128]{1,0:T(1,128)}', space=vmem, size = 0x12000, scoped, tag = 'internal scratch']
  %s0 = inlined_call_operand.vmem [shape: f32[6,4], index: 0, kind: input, shape index: {}]
  %s1 = inlined_call_operand.hbm [shape: f32[4,4], index: 1, kind: output, shape index: {}]
  %s2 = sld [smem:[#allocation0]]
  $region14: #{tpu_custom_call.1} parent=0
    _
  %s4 = ssub.s32 1, %s2
  %s5 = scalar_select 0, %s4, %s2
  $region1: #{tpu_custom_call.1} parent=0
    #allocation2 [shape = 'u8[2048]{0}', space=vmem, size = 0x800, scoped, tag = 'output window, operand 0, single buffered']
    #allocation3 [shape = 's32[1]{0}', space=sflag, size = 0x4, scoped, tag = 'scoped memory for tpu_custom_call.1']
    %6 = vsyncpa [#allocation3], 0
    // Predicated region
    $region2: #{tpu_custom_call.1} parent=1 // pred_check
      _
    $region3: #{tpu_custom_call.1} parent=1 // pred_check_branch
      %8 = sbr.rel (0) target = $region5
    $region4: #{tpu_custom_call.1} parent=1 // pred_region
      _
    $region5: #{tpu_custom_call.1} parent=1 // pred_fallthru
      _
    %v9 = vld [vmem:[%s0] sm:$0xf]
    %v10 = vld [vmem:[%s0 + $0x4] sm:$0x1]
    %v11 = vld [vmem:[%s0 + $0x5] sm:$0x1]
    %v12 = vlaneseq
    %v13 = vshrl.u32 %v12, 7
    %v14 = vsub.s32 0, %v13
    %v15 = vrot.slane %v10, %v14
    %v16 = vmul.f32 %v9, %v15
    %v17 = vlaneseq
    %v18 = vshrl.u32 %v17, 7
    %v19 = vsub.s32 0, %v18
    %v20 = vrot.slane %v11, %v19
    %v21 = vadd.f32 %v16, %v20
    %vm22 = vcmask 27648
    %23 = vst.msk [vmem:[#allocation2] sm:$0xf] %vm22, %v21
    // Predicated region
    $region6: #{tpu_custom_call.1} parent=1 // pred_check
      _
    $region7: #{tpu_custom_call.1} parent=1 // pred_check_branch
      %25 = sbr.rel (0) target = $region9
    $region8: #{tpu_custom_call.1} parent=1 // pred_region
      %s27 = ssub.s32 64, 64
      %28 = vsyncadd [#allocation3], %s27
      %s30 = sshll.u32 [#allocation2], 4
      %s31 = int_to_ptr.vmem [resolvable:$true] %s30
      %33 = dma.vmem_to_hbm [thread:$0]  %s31, 64, %s1, [#allocation3]
    $region9: #{tpu_custom_call.1} parent=1 // pred_fallthru
      _
    // Predicated region
    $region10: #{tpu_custom_call.1} parent=1 // pred_check
      _
    $region11: #{tpu_custom_call.1} parent=1 // pred_check_branch
      %35 = sbr.rel (0) target = $region13
    $region12: #{tpu_custom_call.1} parent=1 // pred_region
      %36 = dma.done [#allocation3], 64
    $region13: #{tpu_custom_call.1} parent=1 // pred_fallthru
      _
    %37 = vsyncpa [#allocation3], 1

</llo_original>
